<compile_context>
chip_gen: v7x
topology: tpu7x:2x2x1
jax: 0.10.0
libtpu: 0.0.40
codegen_flags: <defaults>
</compile_context>

<pallas_src>
import functools

import jax
import jax.numpy as jnp
from jax import lax
from jax.experimental import pallas as pl
from jax.experimental.pallas import tpu as pltpu

MIX_K = 4    # mixture components in the MixExpPhi generator
UNROLL = 8   # Newton steps between convergence checks (amortizes the XLU reduce)


def _phi_inv_kernel(m_ref, negb_ref, mb_ref, a_ref, c_ref, y_ref, t_ref, *,
                    max_iter, tol):
    # m_ref, negb_ref, mb_ref, a_ref, c_ref : (K,) SMEM scalars
    #     m_k, -b_k, m_k*b_k, log(m_k)/b_k, 1/b_k
    # y_ref, t_ref                           : (TB, TN) VMEM tiles
    y = y_ref[...].astype(jnp.float32)
    K = m_ref.shape[0]

    # Hoist all SMEM scalar reads out of the Newton loop (read once, close over).
    m = [m_ref[k] for k in range(K)]
    negb = [negb_ref[k] for k in range(K)]
    mb = [mb_ref[k] for k in range(K)]
    a = [a_ref[k] for k in range(K)]
    c = [c_ref[k] for k in range(K)]

    # Warm start.  phi(t) >= m_k * exp(-b_k * t) for every k, so the true root
    # satisfies  root >= (log m_k - log y)/b_k  for every k.  Taking the max
    # (and max with 0, which is the spec's t0 and handles y >= 1) gives a
    # provable lower bound on the root: Newton on a convex decreasing function
    # from the left converges monotonically with no overshoot.
    ly = jnp.log(jnp.maximum(y, jnp.float32(1e-38)))   # clamp: y=0 stays finite
    t0 = jnp.zeros_like(y)
    for k in range(K):
        t0 = jnp.maximum(t0, a[k] - c[k] * ly)

    def newton_step(t):
        f = jnp.zeros_like(t)
        fp_pos = jnp.zeros_like(t)            # = -phi'(t) > 0
        for k in range(K):                    # static unroll, K small
            e = jnp.exp(negb[k] * t)          # EUP transcendental (binding unit)
            f = f + m[k] * e
            fp_pos = fp_pos + mb[k] * e
        g = f - y
        # Newton: t - g/phi'(t) = t + g / fp_pos.  Approx reciprocal is one EUP
        # push; accuracy is governed by the f32 residual test, not the step.
        inv = pl.reciprocal(jnp.maximum(fp_pos, 1e-30), approx=True)
        return t + g * inv, g

    def cond(state):
        it, _, max_g = state
        return jnp.logical_and(it < max_iter, max_g >= tol)

    def body(state):
        it, t, _ = state
        g = None
        for _ in range(UNROLL):               # check convergence every UNROLL steps
            t, g = newton_step(t)
        return it + UNROLL, t, jnp.max(jnp.abs(g))

    init = (jnp.int32(0), t0, jnp.float32(jnp.inf))
    _, t, _ = lax.while_loop(cond, body, init)
    t_ref[...] = t.astype(t_ref.dtype)


def _pick_tile(dim, unit, cap):
    """Largest multiple of `unit` that divides `dim`, capped at `cap`."""
    t = min(dim, cap)
    t -= t % unit
    while t > unit and dim % t != 0:
        t -= unit
    return t


def phi_inv_forward(y, mix, slope, *, max_iter=2000, tol=1e-6,
                    tile_b=256, tile_n=512):
    """PhiInv.forward: returns t with phi(t) ~= y, elementwise (Newton)."""
    B, N = y.shape
    assert B % 8 == 0 and N % 128 == 0, "layout: B multiple of 8, N multiple of 128"

    tb = _pick_tile(B, 8, tile_b)
    tn = _pick_tile(N, 128, tile_n)
    # v7x has 2 TensorCores: keep >= 2 grid blocks on a 'parallel' axis when the
    # array allows it, otherwise one core idles.
    if (B // tb) * (N // tn) < 2:
        if N // 128 >= 2:
            tn = _pick_tile(N, 128, max(128, tn // 2))
        elif B // 8 >= 2:
            tb = _pick_tile(B, 8, max(8, tb // 2))

    # Parameter glue (not the hot path): softmax of K logits, exp of K slopes,
    # and the per-component constants used by the Newton loop / warm start,
    # computed once here instead of per Newton iteration.
    m = jax.nn.softmax(mix.astype(jnp.float32))
    beta = jnp.exp(slope.astype(jnp.float32))
    negb = -beta
    mb = m * beta
    a = jnp.log(m) / beta        # log(m_k)/b_k   (warm start)
    c = 1.0 / beta               # 1/b_k          (warm start)

    kernel = functools.partial(_phi_inv_kernel, max_iter=max_iter, tol=tol)

    # TODO(synk): PhiInv.FastInverse custom backward (autograd wiring) is not a
    # forward-pass op and is not implemented here; forward returns topt as-is.
    return pl.pallas_call(
        kernel,
        out_shape=jax.ShapeDtypeStruct((B, N), y.dtype),
        grid=(B // tb, N // tn),
        in_specs=[
            pl.BlockSpec(memory_space=pltpu.MemorySpace.SMEM),   # m        (K,)
            pl.BlockSpec(memory_space=pltpu.MemorySpace.SMEM),   # -b       (K,)
            pl.BlockSpec(memory_space=pltpu.MemorySpace.SMEM),   # m*b      (K,)
            pl.BlockSpec(memory_space=pltpu.MemorySpace.SMEM),   # log(m)/b (K,)
            pl.BlockSpec(memory_space=pltpu.MemorySpace.SMEM),   # 1/b      (K,)
            pl.BlockSpec((tb, tn), lambda i, j: (i, j)),         # y tile
        ],
        out_specs=pl.BlockSpec((tb, tn), lambda i, j: (i, j)),
        compiler_params=pltpu.CompilerParams(
            dimension_semantics=("parallel", "parallel")),
    )(m, negb, mb, a, c, y)


if __name__ == "__main__":
    key = jax.random.PRNGKey(0)
    k1, k2, k3 = jax.random.split(key, 3)

    B, N = 8, 256
    # Deterministic synthetic phi parameters (shapes implied by MixExpPhi(K)).
    mix = jax.random.normal(k1, (MIX_K,), dtype=jnp.float32)
    slope = jax.random.normal(k2, (MIX_K,), dtype=jnp.float32)

    # y must lie in phi's range: phi(0) = 1, phi(inf) -> 0  =>  y in (0, 1).
    y = jax.random.uniform(k3, (B, N), dtype=jnp.float32, minval=0.05, maxval=0.95)

    t = phi_inv_forward(y, mix, slope, max_iter=2000, tol=1e-6)
    t = jax.block_until_ready(t)

    # Reference check: phi(t) should reproduce y.
    m = jax.nn.softmax(mix)
    beta = jnp.exp(slope)
    phi_t = jnp.sum(m[None, None, :] * jnp.exp(-beta[None, None, :] * t[..., None]),
                    axis=-1)
    max_resid = float(jnp.max(jnp.abs(phi_t - y)))
    assert max_resid < 1e-5, f"Newton inverse did not converge, max |phi(t)-y| = {max_resid}"

    print("KERNEL_OK")
</pallas_src>

<mosaic_0001>
module attributes {stable_mosaic.version = 11 : i64} {
  func.func @_phi_inv_kernel(%arg0: i32, %arg1: i32, %arg2: memref<4xf32, #tpu.memory_space<smem>>, %arg3: memref<4xf32, #tpu.memory_space<smem>>, %arg4: memref<4xf32, #tpu.memory_space<smem>>, %arg5: memref<4xf32, #tpu.memory_space<smem>>, %arg6: memref<4xf32, #tpu.memory_space<smem>>, %arg7: memref<8x128xf32, #tpu.memory_space<vmem>>, %arg8: memref<8x128xf32, #tpu.memory_space<vmem>>) attributes {dimension_semantics = [#tpu.dimension_semantics<parallel>, #tpu.dimension_semantics<parallel>], iteration_bounds = array<i64: 1, 2>, scalar_prefetch = 0 : i64, scratch_operands = 0 : i64, tpu.core_type = #tpu.core_type<tc>, window_params = [{transform_indices = @transform_0, window_bounds = array<i64: 4>}, {transform_indices = @transform_1, window_bounds = array<i64: 4>}, {transform_indices = @transform_2, window_bounds = array<i64: 4>}, {transform_indices = @transform_3, window_bounds = array<i64: 4>}, {transform_indices = @transform_4, window_bounds = array<i64: 4>}, {transform_indices = @transform_5, window_bounds = array<i64: 8, 128>}, {transform_indices = @transform_6, window_bounds = array<i64: 8, 128>}]} {
    %c0 = arith.constant 0 : index
    %c0_0 = arith.constant 0 : index
    %0 = vector.load %arg7[%c0, %c0_0] : memref<8x128xf32, #tpu.memory_space<vmem>>, vector<8x128xf32>
    %c0_1 = arith.constant 0 : index
    %1 = memref.load %arg2[%c0_1] : memref<4xf32, #tpu.memory_space<smem>>
    %c1 = arith.constant 1 : index
    %2 = memref.load %arg2[%c1] : memref<4xf32, #tpu.memory_space<smem>>
    %c2 = arith.constant 2 : index
    %3 = memref.load %arg2[%c2] : memref<4xf32, #tpu.memory_space<smem>>
    %c3 = arith.constant 3 : index
    %4 = memref.load %arg2[%c3] : memref<4xf32, #tpu.memory_space<smem>>
    %c0_2 = arith.constant 0 : index
    %5 = memref.load %arg3[%c0_2] : memref<4xf32, #tpu.memory_space<smem>>
    %c1_3 = arith.constant 1 : index
    %6 = memref.load %arg3[%c1_3] : memref<4xf32, #tpu.memory_space<smem>>
    %c2_4 = arith.constant 2 : index
    %7 = memref.load %arg3[%c2_4] : memref<4xf32, #tpu.memory_space<smem>>
    %c3_5 = arith.constant 3 : index
    %8 = memref.load %arg3[%c3_5] : memref<4xf32, #tpu.memory_space<smem>>
    %c0_6 = arith.constant 0 : index
    %9 = memref.load %arg4[%c0_6] : memref<4xf32, #tpu.memory_space<smem>>
    %c1_7 = arith.constant 1 : index
    %10 = memref.load %arg4[%c1_7] : memref<4xf32, #tpu.memory_space<smem>>
    %c2_8 = arith.constant 2 : index
    %11 = memref.load %arg4[%c2_8] : memref<4xf32, #tpu.memory_space<smem>>
    %c3_9 = arith.constant 3 : index
    %12 = memref.load %arg4[%c3_9] : memref<4xf32, #tpu.memory_space<smem>>
    %c0_10 = arith.constant 0 : index
    %13 = memref.load %arg5[%c0_10] : memref<4xf32, #tpu.memory_space<smem>>
    %c1_11 = arith.constant 1 : index
    %14 = memref.load %arg5[%c1_11] : memref<4xf32, #tpu.memory_space<smem>>
    %c2_12 = arith.constant 2 : index
    %15 = memref.load %arg5[%c2_12] : memref<4xf32, #tpu.memory_space<smem>>
    %c3_13 = arith.constant 3 : index
    %16 = memref.load %arg5[%c3_13] : memref<4xf32, #tpu.memory_space<smem>>
    %c0_14 = arith.constant 0 : index
    %17 = memref.load %arg6[%c0_14] : memref<4xf32, #tpu.memory_space<smem>>
    %c1_15 = arith.constant 1 : index
    %18 = memref.load %arg6[%c1_15] : memref<4xf32, #tpu.memory_space<smem>>
    %c2_16 = arith.constant 2 : index
    %19 = memref.load %arg6[%c2_16] : memref<4xf32, #tpu.memory_space<smem>>
    %c3_17 = arith.constant 3 : index
    %20 = memref.load %arg6[%c3_17] : memref<4xf32, #tpu.memory_space<smem>>
    %cst = arith.constant 9.99999935E-39 : f32
    %21 = vector.broadcast %cst : f32 to vector<8x128xf32>
    %22 = arith.maximumf %0, %21 : vector<8x128xf32>
    %23 = math.log %22 : vector<8x128xf32>
    %cst_18 = arith.constant 0.000000e+00 : f32
    %24 = vector.broadcast %cst_18 : f32 to vector<8x128xf32>
    %25 = vector.broadcast %17 : f32 to vector<8x128xf32>
    %26 = arith.mulf %25, %23 : vector<8x128xf32>
    %27 = vector.broadcast %13 : f32 to vector<8x128xf32>
    %28 = arith.subf %27, %26 : vector<8x128xf32>
    %29 = arith.maximumf %24, %28 : vector<8x128xf32>
    %30 = vector.broadcast %18 : f32 to vector<8x128xf32>
    %31 = arith.mulf %30, %23 : vector<8x128xf32>
    %32 = vector.broadcast %14 : f32 to vector<8x128xf32>
    %33 = arith.subf %32, %31 : vector<8x128xf32>
    %34 = arith.maximumf %29, %33 : vector<8x128xf32>
    %35 = vector.broadcast %19 : f32 to vector<8x128xf32>
    %36 = arith.mulf %35, %23 : vector<8x128xf32>
    %37 = vector.broadcast %15 : f32 to vector<8x128xf32>
    %38 = arith.subf %37, %36 : vector<8x128xf32>
    %39 = arith.maximumf %34, %38 : vector<8x128xf32>
    %40 = vector.broadcast %20 : f32 to vector<8x128xf32>
    %41 = arith.mulf %40, %23 : vector<8x128xf32>
    %42 = vector.broadcast %16 : f32 to vector<8x128xf32>
    %43 = arith.subf %42, %41 : vector<8x128xf32>
    %44 = arith.maximumf %39, %43 : vector<8x128xf32>
    %c0_i32 = arith.constant 0 : i32
    %cst_19 = arith.constant 0x7F800000 : f32
    %45:3 = scf.while (%arg9 = %c0_i32, %arg10 = %44, %arg11 = %cst_19) : (i32, vector<8x128xf32>, f32) -> (i32, vector<8x128xf32>, f32) {
      %c2000_i32 = arith.constant 2000 : i32
      %47 = arith.cmpi slt, %arg9, %c2000_i32 : i32
      %cst_22 = arith.constant 9.99999997E-7 : f32
      %48 = arith.cmpf oge, %arg11, %cst_22 : f32
      %49 = arith.andi %47, %48 : i1
      scf.condition(%49) %arg9, %arg10, %arg11 : i32, vector<8x128xf32>, f32
    } do {
    ^bb0(%arg9: i32, %arg10: vector<8x128xf32>, %arg11: f32):
      %cst_22 = arith.constant 0.000000e+00 : f32
      %47 = vector.broadcast %cst_22 : f32 to vector<8x128xf32>
      %cst_23 = arith.constant 0.000000e+00 : f32
      %48 = vector.broadcast %cst_23 : f32 to vector<8x128xf32>
      %49 = vector.broadcast %5 : f32 to vector<8x128xf32>
      %50 = arith.mulf %49, %arg10 : vector<8x128xf32>
      %51 = math.exp %50 : vector<8x128xf32>
      %52 = vector.broadcast %1 : f32 to vector<8x128xf32>
      %53 = arith.mulf %52, %51 : vector<8x128xf32>
      %54 = arith.addf %47, %53 : vector<8x128xf32>
      %55 = vector.broadcast %9 : f32 to vector<8x128xf32>
      %56 = arith.mulf %55, %51 : vector<8x128xf32>
      %57 = arith.addf %48, %56 : vector<8x128xf32>
      %58 = vector.broadcast %6 : f32 to vector<8x128xf32>
      %59 = arith.mulf %58, %arg10 : vector<8x128xf32>
      %60 = math.exp %59 : vector<8x128xf32>
      %61 = vector.broadcast %2 : f32 to vector<8x128xf32>
      %62 = arith.mulf %61, %60 : vector<8x128xf32>
      %63 = arith.addf %54, %62 : vector<8x128xf32>
      %64 = vector.broadcast %10 : f32 to vector<8x128xf32>
      %65 = arith.mulf %64, %60 : vector<8x128xf32>
      %66 = arith.addf %57, %65 : vector<8x128xf32>
      %67 = vector.broadcast %7 : f32 to vector<8x128xf32>
      %68 = arith.mulf %67, %arg10 : vector<8x128xf32>
      %69 = math.exp %68 : vector<8x128xf32>
      %70 = vector.broadcast %3 : f32 to vector<8x128xf32>
      %71 = arith.mulf %70, %69 : vector<8x128xf32>
      %72 = arith.addf %63, %71 : vector<8x128xf32>
      %73 = vector.broadcast %11 : f32 to vector<8x128xf32>
      %74 = arith.mulf %73, %69 : vector<8x128xf32>
      %75 = arith.addf %66, %74 : vector<8x128xf32>
      %76 = vector.broadcast %8 : f32 to vector<8x128xf32>
      %77 = arith.mulf %76, %arg10 : vector<8x128xf32>
      %78 = math.exp %77 : vector<8x128xf32>
      %79 = vector.broadcast %4 : f32 to vector<8x128xf32>
      %80 = arith.mulf %79, %78 : vector<8x128xf32>
      %81 = arith.addf %72, %80 : vector<8x128xf32>
      %82 = vector.broadcast %12 : f32 to vector<8x128xf32>
      %83 = arith.mulf %82, %78 : vector<8x128xf32>
      %84 = arith.addf %75, %83 : vector<8x128xf32>
      %85 = arith.subf %81, %0 : vector<8x128xf32>
      %cst_24 = arith.constant 1.000000e-30 : f32
      %86 = vector.broadcast %cst_24 : f32 to vector<8x128xf32>
      %87 = arith.maximumf %84, %86 : vector<8x128xf32>
      %88 = tpu.reciprocal %87 {approx = true} : vector<8x128xf32> -> vector<8x128xf32>
      %89 = arith.mulf %85, %88 : vector<8x128xf32>
      %90 = arith.addf %arg10, %89 : vector<8x128xf32>
      %cst_25 = arith.constant 0.000000e+00 : f32
      %91 = vector.broadcast %cst_25 : f32 to vector<8x128xf32>
      %cst_26 = arith.constant 0.000000e+00 : f32
      %92 = vector.broadcast %cst_26 : f32 to vector<8x128xf32>
      %93 = vector.broadcast %5 : f32 to vector<8x128xf32>
      %94 = arith.mulf %93, %90 : vector<8x128xf32>
      %95 = math.exp %94 : vector<8x128xf32>
      %96 = vector.broadcast %1 : f32 to vector<8x128xf32>
      %97 = arith.mulf %96, %95 : vector<8x128xf32>
      %98 = arith.addf %91, %97 : vector<8x128xf32>
      %99 = vector.broadcast %9 : f32 to vector<8x128xf32>
      %100 = arith.mulf %99, %95 : vector<8x128xf32>
      %101 = arith.addf %92, %100 : vector<8x128xf32>
      %102 = vector.broadcast %6 : f32 to vector<8x128xf32>
      %103 = arith.mulf %102, %90 : vector<8x128xf32>
      %104 = math.exp %103 : vector<8x128xf32>
      %105 = vector.broadcast %2 : f32 to vector<8x128xf32>
      %106 = arith.mulf %105, %104 : vector<8x128xf32>
      %107 = arith.addf %98, %106 : vector<8x128xf32>
      %108 = vector.broadcast %10 : f32 to vector<8x128xf32>
      %109 = arith.mulf %108, %104 : vector<8x128xf32>
      %110 = arith.addf %101, %109 : vector<8x128xf32>
      %111 = vector.broadcast %7 : f32 to vector<8x128xf32>
      %112 = arith.mulf %111, %90 : vector<8x128xf32>
      %113 = math.exp %112 : vector<8x128xf32>
      %114 = vector.broadcast %3 : f32 to vector<8x128xf32>
      %115 = arith.mulf %114, %113 : vector<8x128xf32>
      %116 = arith.addf %107, %115 : vector<8x128xf32>
      %117 = vector.broadcast %11 : f32 to vector<8x128xf32>
      %118 = arith.mulf %117, %113 : vector<8x128xf32>
      %119 = arith.addf %110, %118 : vector<8x128xf32>
      %120 = vector.broadcast %8 : f32 to vector<8x128xf32>
      %121 = arith.mulf %120, %90 : vector<8x128xf32>
      %122 = math.exp %121 : vector<8x128xf32>
      %123 = vector.broadcast %4 : f32 to vector<8x128xf32>
      %124 = arith.mulf %123, %122 : vector<8x128xf32>
      %125 = arith.addf %116, %124 : vector<8x128xf32>
      %126 = vector.broadcast %12 : f32 to vector<8x128xf32>
      %127 = arith.mulf %126, %122 : vector<8x128xf32>
      %128 = arith.addf %119, %127 : vector<8x128xf32>
      %129 = arith.subf %125, %0 : vector<8x128xf32>
      %cst_27 = arith.constant 1.000000e-30 : f32
      %130 = vector.broadcast %cst_27 : f32 to vector<8x128xf32>
      %131 = arith.maximumf %128, %130 : vector<8x128xf32>
      %132 = tpu.reciprocal %131 {approx = true} : vector<8x128xf32> -> vector<8x128xf32>
      %133 = arith.mulf %129, %132 : vector<8x128xf32>
      %134 = arith.addf %90, %133 : vector<8x128xf32>
      %cst_28 = arith.constant 0.000000e+00 : f32
      %135 = vector.broadcast %cst_28 : f32 to vector<8x128xf32>
      %cst_29 = arith.constant 0.000000e+00 : f32
      %136 = vector.broadcast %cst_29 : f32 to vector<8x128xf32>
      %137 = vector.broadcast %5 : f32 to vector<8x128xf32>
      %138 = arith.mulf %137, %134 : vector<8x128xf32>
      %139 = math.exp %138 : vector<8x128xf32>
      %140 = vector.broadcast %1 : f32 to vector<8x128xf32>
      %141 = arith.mulf %140, %139 : vector<8x128xf32>
      %142 = arith.addf %135, %141 : vector<8x128xf32>
      %143 = vector.broadcast %9 : f32 to vector<8x128xf32>
      %144 = arith.mulf %143, %139 : vector<8x128xf32>
      %145 = arith.addf %136, %144 : vector<8x128xf32>
      %146 = vector.broadcast %6 : f32 to vector<8x128xf32>
      %147 = arith.mulf %146, %134 : vector<8x128xf32>
      %148 = math.exp %147 : vector<8x128xf32>
      %149 = vector.broadcast %2 : f32 to vector<8x128xf32>
      %150 = arith.mulf %149, %148 : vector<8x128xf32>
      %151 = arith.addf %142, %150 : vector<8x128xf32>
      %152 = vector.broadcast %10 : f32 to vector<8x128xf32>
      %153 = arith.mulf %152, %148 : vector<8x128xf32>
      %154 = arith.addf %145, %153 : vector<8x128xf32>
      %155 = vector.broadcast %7 : f32 to vector<8x128xf32>
      %156 = arith.mulf %155, %134 : vector<8x128xf32>
      %157 = math.exp %156 : vector<8x128xf32>
      %158 = vector.broadcast %3 : f32 to vector<8x128xf32>
      %159 = arith.mulf %158, %157 : vector<8x128xf32>
      %160 = arith.addf %151, %159 : vector<8x128xf32>
      %161 = vector.broadcast %11 : f32 to vector<8x128xf32>
      %162 = arith.mulf %161, %157 : vector<8x128xf32>
      %163 = arith.addf %154, %162 : vector<8x128xf32>
      %164 = vector.broadcast %8 : f32 to vector<8x128xf32>
      %165 = arith.mulf %164, %134 : vector<8x128xf32>
      %166 = math.exp %165 : vector<8x128xf32>
      %167 = vector.broadcast %4 : f32 to vector<8x128xf32>
      %168 = arith.mulf %167, %166 : vector<8x128xf32>
      %169 = arith.addf %160, %168 : vector<8x128xf32>
      %170 = vector.broadcast %12 : f32 to vector<8x128xf32>
      %171 = arith.mulf %170, %166 : vector<8x128xf32>
      %172 = arith.addf %163, %171 : vector<8x128xf32>
      %173 = arith.subf %169, %0 : vector<8x128xf32>
      %cst_30 = arith.constant 1.000000e-30 : f32
      %174 = vector.broadcast %cst_30 : f32 to vector<8x128xf32>
      %175 = arith.maximumf %172, %174 : vector<8x128xf32>
      %176 = tpu.reciprocal %175 {approx = true} : vector<8x128xf32> -> vector<8x128xf32>
      %177 = arith.mulf %173, %176 : vector<8x128xf32>
      %178 = arith.addf %134, %177 : vector<8x128xf32>
      %cst_31 = arith.constant 0.000000e+00 : f32
      %179 = vector.broadcast %cst_31 : f32 to vector<8x128xf32>
      %cst_32 = arith.constant 0.000000e+00 : f32
      %180 = vector.broadcast %cst_32 : f32 to vector<8x128xf32>
      %181 = vector.broadcast %5 : f32 to vector<8x128xf32>
      %182 = arith.mulf %181, %178 : vector<8x128xf32>
      %183 = math.exp %182 : vector<8x128xf32>
      %184 = vector.broadcast %1 : f32 to vector<8x128xf32>
      %185 = arith.mulf %184, %183 : vector<8x128xf32>
      %186 = arith.addf %179, %185 : vector<8x128xf32>
      %187 = vector.broadcast %9 : f32 to vector<8x128xf32>
      %188 = arith.mulf %187, %183 : vector<8x128xf32>
      %189 = arith.addf %180, %188 : vector<8x128xf32>
      %190 = vector.broadcast %6 : f32 to vector<8x128xf32>
      %191 = arith.mulf %190, %178 : vector<8x128xf32>
      %192 = math.exp %191 : vector<8x128xf32>
      %193 = vector.broadcast %2 : f32 to vector<8x128xf32>
      %194 = arith.mulf %193, %192 : vector<8x128xf32>
      %195 = arith.addf %186, %194 : vector<8x128xf32>
      %196 = vector.broadcast %10 : f32 to vector<8x128xf32>
      %197 = arith.mulf %196, %192 : vector<8x128xf32>
      %198 = arith.addf %189, %197 : vector<8x128xf32>
      %199 = vector.broadcast %7 : f32 to vector<8x128xf32>
      %200 = arith.mulf %199, %178 : vector<8x128xf32>
      %201 = math.exp %200 : vector<8x128xf32>
      %202 = vector.broadcast %3 : f32 to vector<8x128xf32>
      %203 = arith.mulf %202, %201 : vector<8x128xf32>
      %204 = arith.addf %195, %203 : vector<8x128xf32>
      %205 = vector.broadcast %11 : f32 to vector<8x128xf32>
      %206 = arith.mulf %205, %201 : vector<8x128xf32>
      %207 = arith.addf %198, %206 : vector<8x128xf32>
      %208 = vector.broadcast %8 : f32 to vector<8x128xf32>
      %209 = arith.mulf %208, %178 : vector<8x128xf32>
      %210 = math.exp %209 : vector<8x128xf32>
      %211 = vector.broadcast %4 : f32 to vector<8x128xf32>
      %212 = arith.mulf %211, %210 : vector<8x128xf32>
      %213 = arith.addf %204, %212 : vector<8x128xf32>
      %214 = vector.broadcast %12 : f32 to vector<8x128xf32>
      %215 = arith.mulf %214, %210 : vector<8x128xf32>
      %216 = arith.addf %207, %215 : vector<8x128xf32>
      %217 = arith.subf %213, %0 : vector<8x128xf32>
      %cst_33 = arith.constant 1.000000e-30 : f32
      %218 = vector.broadcast %cst_33 : f32 to vector<8x128xf32>
      %219 = arith.maximumf %216, %218 : vector<8x128xf32>
      %220 = tpu.reciprocal %219 {approx = true} : vector<8x128xf32> -> vector<8x128xf32>
      %221 = arith.mulf %217, %220 : vector<8x128xf32>
      %222 = arith.addf %178, %221 : vector<8x128xf32>
      %cst_34 = arith.constant 0.000000e+00 : f32
      %223 = vector.broadcast %cst_34 : f32 to vector<8x128xf32>
      %cst_35 = arith.constant 0.000000e+00 : f32
      %224 = vector.broadcast %cst_35 : f32 to vector<8x128xf32>
      %225 = vector.broadcast %5 : f32 to vector<8x128xf32>
      %226 = arith.mulf %225, %222 : vector<8x128xf32>
      %227 = math.exp %226 : vector<8x128xf32>
      %228 = vector.broadcast %1 : f32 to vector<8x128xf32>
      %229 = arith.mulf %228, %227 : vector<8x128xf32>
      %230 = arith.addf %223, %229 : vector<8x128xf32>
      %231 = vector.broadcast %9 : f32 to vector<8x128xf32>
      %232 = arith.mulf %231, %227 : vector<8x128xf32>
      %233 = arith.addf %224, %232 : vector<8x128xf32>
      %234 = vector.broadcast %6 : f32 to vector<8x128xf32>
      %235 = arith.mulf %234, %222 : vector<8x128xf32>
      %236 = math.exp %235 : vector<8x128xf32>
      %237 = vector.broadcast %2 : f32 to vector<8x128xf32>
      %238 = arith.mulf %237, %236 : vector<8x128xf32>
      %239 = arith.addf %230, %238 : vector<8x128xf32>
      %240 = vector.broadcast %10 : f32 to vector<8x128xf32>
      %241 = arith.mulf %240, %236 : vector<8x128xf32>
      %242 = arith.addf %233, %241 : vector<8x128xf32>
      %243 = vector.broadcast %7 : f32 to vector<8x128xf32>
      %244 = arith.mulf %243, %222 : vector<8x128xf32>
      %245 = math.exp %244 : vector<8x128xf32>
      %246 = vector.broadcast %3 : f32 to vector<8x128xf32>
      %247 = arith.mulf %246, %245 : vector<8x128xf32>
      %248 = arith.addf %239, %247 : vector<8x128xf32>
      %249 = vector.broadcast %11 : f32 to vector<8x128xf32>
      %250 = arith.mulf %249, %245 : vector<8x128xf32>
      %251 = arith.addf %242, %250 : vector<8x128xf32>
      %252 = vector.broadcast %8 : f32 to vector<8x128xf32>
      %253 = arith.mulf %252, %222 : vector<8x128xf32>
      %254 = math.exp %253 : vector<8x128xf32>
      %255 = vector.broadcast %4 : f32 to vector<8x128xf32>
      %256 = arith.mulf %255, %254 : vector<8x128xf32>
      %257 = arith.addf %248, %256 : vector<8x128xf32>
      %258 = vector.broadcast %12 : f32 to vector<8x128xf32>
      %259 = arith.mulf %258, %254 : vector<8x128xf32>
      %260 = arith.addf %251, %259 : vector<8x128xf32>
      %261 = arith.subf %257, %0 : vector<8x128xf32>
      %cst_36 = arith.constant 1.000000e-30 : f32
      %262 = vector.broadcast %cst_36 : f32 to vector<8x128xf32>
      %263 = arith.maximumf %260, %262 : vector<8x128xf32>
      %264 = tpu.reciprocal %263 {approx = true} : vector<8x128xf32> -> vector<8x128xf32>
      %265 = arith.mulf %261, %264 : vector<8x128xf32>
      %266 = arith.addf %222, %265 : vector<8x128xf32>
      %cst_37 = arith.constant 0.000000e+00 : f32
      %267 = vector.broadcast %cst_37 : f32 to vector<8x128xf32>
      %cst_38 = arith.constant 0.000000e+00 : f32
      %268 = vector.broadcast %cst_38 : f32 to vector<8x128xf32>
      %269 = vector.broadcast %5 : f32 to vector<8x128xf32>
      %270 = arith.mulf %269, %266 : vector<8x128xf32>
      %271 = math.exp %270 : vector<8x128xf32>
      %272 = vector.broadcast %1 : f32 to vector<8x128xf32>
      %273 = arith.mulf %272, %271 : vector<8x128xf32>
      %274 = arith.addf %267, %273 : vector<8x128xf32>
      %275 = vector.broadcast %9 : f32 to vector<8x128xf32>
      %276 = arith.mulf %275, %271 : vector<8x128xf32>
      %277 = arith.addf %268, %276 : vector<8x128xf32>
      %278 = vector.broadcast %6 : f32 to vector<8x128xf32>
      %279 = arith.mulf %278, %266 : vector<8x128xf32>
      %280 = math.exp %279 : vector<8x128xf32>
      %281 = vector.broadcast %2 : f32 to vector<8x128xf32>
      %282 = arith.mulf %281, %280 : vector<8x128xf32>
      %283 = arith.addf %274, %282 : vector<8x128xf32>
      %284 = vector.broadcast %10 : f32 to vector<8x128xf32>
      %285 = arith.mulf %284, %280 : vector<8x128xf32>
      %286 = arith.addf %277, %285 : vector<8x128xf32>
      %287 = vector.broadcast %7 : f32 to vector<8x128xf32>
      %288 = arith.mulf %287, %266 : vector<8x128xf32>
      %289 = math.exp %288 : vector<8x128xf32>
      %290 = vector.broadcast %3 : f32 to vector<8x128xf32>
      %291 = arith.mulf %290, %289 : vector<8x128xf32>
      %292 = arith.addf %283, %291 : vector<8x128xf32>
      %293 = vector.broadcast %11 : f32 to vector<8x128xf32>
      %294 = arith.mulf %293, %289 : vector<8x128xf32>
      %295 = arith.addf %286, %294 : vector<8x128xf32>
      %296 = vector.broadcast %8 : f32 to vector<8x128xf32>
      %297 = arith.mulf %296, %266 : vector<8x128xf32>
      %298 = math.exp %297 : vector<8x128xf32>
      %299 = vector.broadcast %4 : f32 to vector<8x128xf32>
      %300 = arith.mulf %299, %298 : vector<8x128xf32>
      %301 = arith.addf %292, %300 : vector<8x128xf32>
      %302 = vector.broadcast %12 : f32 to vector<8x128xf32>
      %303 = arith.mulf %302, %298 : vector<8x128xf32>
      %304 = arith.addf %295, %303 : vector<8x128xf32>
      %305 = arith.subf %301, %0 : vector<8x128xf32>
      %cst_39 = arith.constant 1.000000e-30 : f32
      %306 = vector.broadcast %cst_39 : f32 to vector<8x128xf32>
      %307 = arith.maximumf %304, %306 : vector<8x128xf32>
      %308 = tpu.reciprocal %307 {approx = true} : vector<8x128xf32> -> vector<8x128xf32>
      %309 = arith.mulf %305, %308 : vector<8x128xf32>
      %310 = arith.addf %266, %309 : vector<8x128xf32>
      %cst_40 = arith.constant 0.000000e+00 : f32
      %311 = vector.broadcast %cst_40 : f32 to vector<8x128xf32>
      %cst_41 = arith.constant 0.000000e+00 : f32
      %312 = vector.broadcast %cst_41 : f32 to vector<8x128xf32>
      %313 = vector.broadcast %5 : f32 to vector<8x128xf32>
      %314 = arith.mulf %313, %310 : vector<8x128xf32>
      %315 = math.exp %314 : vector<8x128xf32>
      %316 = vector.broadcast %1 : f32 to vector<8x128xf32>
      %317 = arith.mulf %316, %315 : vector<8x128xf32>
      %318 = arith.addf %311, %317 : vector<8x128xf32>
      %319 = vector.broadcast %9 : f32 to vector<8x128xf32>
      %320 = arith.mulf %319, %315 : vector<8x128xf32>
      %321 = arith.addf %312, %320 : vector<8x128xf32>
      %322 = vector.broadcast %6 : f32 to vector<8x128xf32>
      %323 = arith.mulf %322, %310 : vector<8x128xf32>
      %324 = math.exp %323 : vector<8x128xf32>
      %325 = vector.broadcast %2 : f32 to vector<8x128xf32>
      %326 = arith.mulf %325, %324 : vector<8x128xf32>
      %327 = arith.addf %318, %326 : vector<8x128xf32>
      %328 = vector.broadcast %10 : f32 to vector<8x128xf32>
      %329 = arith.mulf %328, %324 : vector<8x128xf32>
      %330 = arith.addf %321, %329 : vector<8x128xf32>
      %331 = vector.broadcast %7 : f32 to vector<8x128xf32>
      %332 = arith.mulf %331, %310 : vector<8x128xf32>
      %333 = math.exp %332 : vector<8x128xf32>
      %334 = vector.broadcast %3 : f32 to vector<8x128xf32>
      %335 = arith.mulf %334, %333 : vector<8x128xf32>
      %336 = arith.addf %327, %335 : vector<8x128xf32>
      %337 = vector.broadcast %11 : f32 to vector<8x128xf32>
      %338 = arith.mulf %337, %333 : vector<8x128xf32>
      %339 = arith.addf %330, %338 : vector<8x128xf32>
      %340 = vector.broadcast %8 : f32 to vector<8x128xf32>
      %341 = arith.mulf %340, %310 : vector<8x128xf32>
      %342 = math.exp %341 : vector<8x128xf32>
      %343 = vector.broadcast %4 : f32 to vector<8x128xf32>
      %344 = arith.mulf %343, %342 : vector<8x128xf32>
      %345 = arith.addf %336, %344 : vector<8x128xf32>
      %346 = vector.broadcast %12 : f32 to vector<8x128xf32>
      %347 = arith.mulf %346, %342 : vector<8x128xf32>
      %348 = arith.addf %339, %347 : vector<8x128xf32>
      %349 = arith.subf %345, %0 : vector<8x128xf32>
      %cst_42 = arith.constant 1.000000e-30 : f32
      %350 = vector.broadcast %cst_42 : f32 to vector<8x128xf32>
      %351 = arith.maximumf %348, %350 : vector<8x128xf32>
      %352 = tpu.reciprocal %351 {approx = true} : vector<8x128xf32> -> vector<8x128xf32>
      %353 = arith.mulf %349, %352 : vector<8x128xf32>
      %354 = arith.addf %310, %353 : vector<8x128xf32>
      %cst_43 = arith.constant 0.000000e+00 : f32
      %355 = vector.broadcast %cst_43 : f32 to vector<8x128xf32>
      %cst_44 = arith.constant 0.000000e+00 : f32
      %356 = vector.broadcast %cst_44 : f32 to vector<8x128xf32>
      %357 = vector.broadcast %5 : f32 to vector<8x128xf32>
      %358 = arith.mulf %357, %354 : vector<8x128xf32>
      %359 = math.exp %358 : vector<8x128xf32>
      %360 = vector.broadcast %1 : f32 to vector<8x128xf32>
      %361 = arith.mulf %360, %359 : vector<8x128xf32>
      %362 = arith.addf %355, %361 : vector<8x128xf32>
      %363 = vector.broadcast %9 : f32 to vector<8x128xf32>
      %364 = arith.mulf %363, %359 : vector<8x128xf32>
      %365 = arith.addf %356, %364 : vector<8x128xf32>
      %366 = vector.broadcast %6 : f32 to vector<8x128xf32>
      %367 = arith.mulf %366, %354 : vector<8x128xf32>
      %368 = math.exp %367 : vector<8x128xf32>
      %369 = vector.broadcast %2 : f32 to vector<8x128xf32>
      %370 = arith.mulf %369, %368 : vector<8x128xf32>
      %371 = arith.addf %362, %370 : vector<8x128xf32>
      %372 = vector.broadcast %10 : f32 to vector<8x128xf32>
      %373 = arith.mulf %372, %368 : vector<8x128xf32>
      %374 = arith.addf %365, %373 : vector<8x128xf32>
      %375 = vector.broadcast %7 : f32 to vector<8x128xf32>
      %376 = arith.mulf %375, %354 : vector<8x128xf32>
      %377 = math.exp %376 : vector<8x128xf32>
      %378 = vector.broadcast %3 : f32 to vector<8x128xf32>
      %379 = arith.mulf %378, %377 : vector<8x128xf32>
      %380 = arith.addf %371, %379 : vector<8x128xf32>
      %381 = vector.broadcast %11 : f32 to vector<8x128xf32>
      %382 = arith.mulf %381, %377 : vector<8x128xf32>
      %383 = arith.addf %374, %382 : vector<8x128xf32>
      %384 = vector.broadcast %8 : f32 to vector<8x128xf32>
      %385 = arith.mulf %384, %354 : vector<8x128xf32>
      %386 = math.exp %385 : vector<8x128xf32>
      %387 = vector.broadcast %4 : f32 to vector<8x128xf32>
      %388 = arith.mulf %387, %386 : vector<8x128xf32>
      %389 = arith.addf %380, %388 : vector<8x128xf32>
      %390 = vector.broadcast %12 : f32 to vector<8x128xf32>
      %391 = arith.mulf %390, %386 : vector<8x128xf32>
      %392 = arith.addf %383, %391 : vector<8x128xf32>
      %393 = arith.subf %389, %0 : vector<8x128xf32>
      %cst_45 = arith.constant 1.000000e-30 : f32
      %394 = vector.broadcast %cst_45 : f32 to vector<8x128xf32>
      %395 = arith.maximumf %392, %394 : vector<8x128xf32>
      %396 = tpu.reciprocal %395 {approx = true} : vector<8x128xf32> -> vector<8x128xf32>
      %397 = arith.mulf %393, %396 : vector<8x128xf32>
      %398 = arith.addf %354, %397 : vector<8x128xf32>
      %c8_i32 = arith.constant 8 : i32
      %399 = arith.addi %arg9, %c8_i32 : i32
      %400 = math.absf %393 : vector<8x128xf32>
      %401 = vector.shape_cast %400 : vector<8x128xf32> to vector<1x8x128xf32>
      %cst_46 = arith.constant dense<0xFF800000> : vector<1xf32>
      %402 = vector.multi_reduction <maximumf>, %401, %cst_46 [1, 2] : vector<1x8x128xf32> to vector<1xf32>
      %403 = vector.shape_cast %402 : vector<1xf32> to vector<1x1x1xf32>
      %404 = vector.extract %403[0, 0, 0] : f32 from vector<1x1x1xf32>
      scf.yield %399, %398, %404 : i32, vector<8x128xf32>, f32
    }
    %c0_20 = arith.constant 0 : index
    %c0_21 = arith.constant 0 : index
    %46 = vector.load %arg8[%c0_20, %c0_21] : memref<8x128xf32, #tpu.memory_space<vmem>>, vector<8x128xf32>
    tpu.vector_store %arg8[%c0_20, %c0_21], %45#1 {strides = array<i32>} : memref<8x128xf32, #tpu.memory_space<vmem>>, vector<8x128xf32>,
    return
  }
  func.func @transform_0(%arg0: i32, %arg1: i32) -> i32 {
    %c0_i32 = arith.constant 0 : i32
    %c0_i32_0 = arith.constant 0 : i32
    return %c0_i32 : i32
  }
  func.func @transform_1(%arg0: i32, %arg1: i32) -> i32 {
    %c0_i32 = arith.constant 0 : i32
    %c0_i32_0 = arith.constant 0 : i32
    return %c0_i32 : i32
  }
  func.func @transform_2(%arg0: i32, %arg1: i32) -> i32 {
    %c0_i32 = arith.constant 0 : i32
    %c0_i32_0 = arith.constant 0 : i32
    return %c0_i32 : i32
  }
  func.func @transform_3(%arg0: i32, %arg1: i32) -> i32 {
    %c0_i32 = arith.constant 0 : i32
    %c0_i32_0 = arith.constant 0 : i32
    return %c0_i32 : i32
  }
  func.func @transform_4(%arg0: i32, %arg1: i32) -> i32 {
    %c0_i32 = arith.constant 0 : i32
    %c0_i32_0 = arith.constant 0 : i32
    return %c0_i32 : i32
  }
  func.func @transform_5(%arg0: i32, %arg1: i32) -> (i32, i32) {
    %c0_i32 = arith.constant 0 : i32
    return %arg0, %arg1 : i32, i32
  }
  func.func @transform_6(%arg0: i32, %arg1: i32) -> (i32, i32) {
    %c0_i32 = arith.constant 0 : i32
    return %arg0, %arg1 : i32, i32
  }
}

</mosaic_0001>

<llo_original>
// kernel: tpu_custom_call.1
$region0: #{tpu_custom_call.1}
  #allocation0 [shape = 'u32[]', space=smem, size = 0x4, offset = 0x4, fixed_abs, tag = 'smem constant byte address 0x4 - core index']
  #allocation1 [shape = 'u32[144,128]{1,0:T(1,128)}', space=vmem, size = 0x12000, scoped, tag = 'internal scratch']
  %s0 = inlined_call_operand.hbm [shape: f32[4], index: 0, kind: input, shape index: {}]
  %s1 = inlined_call_operand.vmem [shape: f32[4], index: 1, kind: input, shape index: {}]
  %s2 = inlined_call_operand.vmem [shape: f32[4], index: 2, kind: input, shape index: {}]
  %s3 = inlined_call_operand.hbm [shape: f32[4], index: 3, kind: input, shape index: {}]
  %s4 = inlined_call_operand.hbm [shape: f32[4], index: 4, kind: input, shape index: {}]
  %s5 = inlined_call_operand.vmem [shape: f32[8,256], index: 5, kind: input, shape index: {}]
  %s6 = inlined_call_operand.hbm [shape: f32[8,256], index: 6, kind: output, shape index: {}]
  %s7 = sld [smem:[#allocation0]]
  $region84: #{tpu_custom_call.1} parent=0
    _
  %s9 = ssub.s32 1, %s7
  %s10 = scalar_select 0, %s9, %s7
  $region1: #{tpu_custom_call.1} parent=0
    #allocation2 [shape = 'u8[512]{0}', space=smem, size = 0x200, scoped, tag = 'input window, operand 0, single buffered']
    #allocation3 [shape = 's32[2]{0}', space=sflag, size = 0x8, scoped, tag = 'scoped memory for tpu_custom_call.1']
    #allocation4 [shape = 's32[2]{0}', space=sflag, size = 0x8, scoped, tag = 'scoped memory for tpu_custom_call.1']
    #allocation5 [shape = 's32[2]{0}', space=sflag, size = 0x8, scoped, tag = 'scoped memory for tpu_custom_call.1']
    #allocation6 [shape = 'u8[512]{0}', space=smem, size = 0x200, scoped, tag = 'input window, operand 1, single buffered']
    #allocation7 [shape = 'u8[512]{0}', space=smem, size = 0x200, scoped, tag = 'input window, operand 2, single buffered']
    #allocation8 [shape = 's32[1]{0}', space=sflag, size = 0x4, scoped, tag = 'scoped memory for tpu_custom_call.1']
    #allocation9 [shape = 'u8[512]{0}', space=smem, size = 0x200, scoped, tag = 'input window, operand 3, single buffered']
    #allocation10 [shape = 's32[1]{0}', space=sflag, size = 0x4, scoped, tag = 'scoped memory for tpu_custom_call.1']
    #allocation11 [shape = 'u8[512]{0}', space=smem, size = 0x200, scoped, tag = 'input window, operand 4, single buffered']
    #allocation12 [shape = 'u8[8192]{0}', space=vmem, size = 0x2000, scoped, tag = 'output window, operand 0']
    %11 = vsyncpa [#allocation4], 0
    %12 = vsyncpa [#allocation5], 0
    %13 = vsyncpa [#allocation8], 0
    %14 = vsyncpa [#allocation10], 0
    %15 = vsyncpa [#allocation3], 0
    %s16 = scalar_lea.sflag [#allocation3], 1
    %17 = vsyncpa %s16, 0
    loop: start=0, step=1, limit=4
    $region2: #{tpu_custom_call.1} parent=1 // loop_pre_header
      _
    $region3: #{tpu_custom_call.1} parent=1 // loop_header
      %s19 = sphi 0, %s23
      %p20 = scmp.ge.s32.totalorder %s19, 4
      %s26 = sphi 0, %s38
      %s27 = sphi 0, %s34
      %s28 = sphi 0, %s26
      %s29 = sphi 0, %s27
      %s30 = sphi 0, %s28
      %s31 = sphi 0, %s29
      %s39 = sphi 0, %s39
      %s41 = sphi 0, %s39
      %s42 = sphi 0, %s41
      %s56 = sphi 0, %s42
      %s60 = sphi 0, %s60
      %s62 = sphi 0, %s60
      %s63 = sphi 0, %s62
      %s77 = sphi 0, %s63
      %s81 = sphi 0, %s81
      %s83 = sphi 0, %s81
      %s84 = sphi 0, %s83
      %s98 = sphi 0, %s84
      %s102 = sphi 0, %s102
      %s104 = sphi 0, %s102
      %s105 = sphi 0, %s104
      %s119 = sphi 0, %s105
      %s123 = sphi 0, %s123
      %s125 = sphi 0, %s123
      %s126 = sphi 0, %s125
      %s140 = sphi 0, %s126
      %s148 = sphi 0, %s150
      %s151 = sphi 0, %s148
      %s152 = sphi 0, %s151
      %s168 = sphi 0, %s152
      %s176 = sphi 0, %s178
      %s179 = sphi 0, %s176
      %s180 = sphi 0, %s179
      %s196 = sphi 0, %s180
    $region4: #{tpu_custom_call.1} parent=1 // loop_header_branch
      %22 = sbr.rel (%p20) target = $region8
    $region5: #{tpu_custom_call.1} parent=1 // loop_body
      %s24 = ssub.s32 %s19, 1
      %s25 = ssub.s32 %s19, 2
      %s32 = sadd.s32 1, %s27
      %p33 = scmp.ge.s32.totalorder %s32, 2
      %s34 = scalar_select %p33, 0, %s32
      %s35 = sadd.s32 1, %s26
      %s36 = scalar_select %p33, %s35, %s26
      %p37 = scmp.ge.s32.totalorder %s36, 1
      %s38 = scalar_select %p37, 0, %s36
      %s40 = sadd.s32 %s39, 1
      %p43 = scmp.eq.s32.totalorder %s19, 1
      %p44 = scmp.ne.s32.totalorder %s39, %s41
      %p45 = scmp.eq.s32.totalorder %s19, 0
      %p46 = por %p44, %p45
      %p47 = scmp.ne.s32.totalorder %s39, %s41
      %p48 = scmp.eq.s32.totalorder %s24, 1
      %p49 = por %p47, %p48
      %p50 = scmp.ne.s32.totalorder %s41, %s42
      %p51 = scmp.eq.s32.totalorder %s24, 0
      %p52 = por %p50, %p51
      %p53 = scmp.ne.s32.totalorder %s41, %s42
      %p54 = scmp.eq.s32.totalorder %s25, 1
      %p55 = por %p53, %p54
      %p57 = scmp.ne.s32.totalorder %s42, %s56
      %p58 = scmp.eq.s32.totalorder %s25, 0
      %p59 = por %p57, %p58
      %s61 = sadd.s32 %s60, 1
      %p64 = scmp.eq.s32.totalorder %s19, 1
      %p65 = scmp.ne.s32.totalorder %s60, %s62
      %p66 = scmp.eq.s32.totalorder %s19, 0
      %p67 = por %p65, %p66
      %p68 = scmp.ne.s32.totalorder %s60, %s62
      %p69 = scmp.eq.s32.totalorder %s24, 1
      %p70 = por %p68, %p69
      %p71 = scmp.ne.s32.totalorder %s62, %s63
      %p72 = scmp.eq.s32.totalorder %s24, 0
      %p73 = por %p71, %p72
      %p74 = scmp.ne.s32.totalorder %s62, %s63
      %p75 = scmp.eq.s32.totalorder %s25, 1
      %p76 = por %p74, %p75
      %p78 = scmp.ne.s32.totalorder %s63, %s77
      %p79 = scmp.eq.s32.totalorder %s25, 0
      %p80 = por %p78, %p79
      %s82 = sadd.s32 %s81, 1
      %p85 = scmp.eq.s32.totalorder %s19, 1
      %p86 = scmp.ne.s32.totalorder %s81, %s83
      %p87 = scmp.eq.s32.totalorder %s19, 0
      %p88 = por %p86, %p87
      %p89 = scmp.ne.s32.totalorder %s81, %s83
      %p90 = scmp.eq.s32.totalorder %s24, 1
      %p91 = por %p89, %p90
      %p92 = scmp.ne.s32.totalorder %s83, %s84
      %p93 = scmp.eq.s32.totalorder %s24, 0
      %p94 = por %p92, %p93
      %p95 = scmp.ne.s32.totalorder %s83, %s84
      %p96 = scmp.eq.s32.totalorder %s25, 1
      %p97 = por %p95, %p96
      %p99 = scmp.ne.s32.totalorder %s84, %s98
      %p100 = scmp.eq.s32.totalorder %s25, 0
      %p101 = por %p99, %p100
      %s103 = sadd.s32 %s102, 1
      %p106 = scmp.eq.s32.totalorder %s19, 1
      %p107 = scmp.ne.s32.totalorder %s102, %s104
      %p108 = scmp.eq.s32.totalorder %s19, 0
      %p109 = por %p107, %p108
      %p110 = scmp.ne.s32.totalorder %s102, %s104
      %p111 = scmp.eq.s32.totalorder %s24, 1
      %p112 = por %p110, %p111
      %p113 = scmp.ne.s32.totalorder %s104, %s105
      %p114 = scmp.eq.s32.totalorder %s24, 0
      %p115 = por %p113, %p114
      %p116 = scmp.ne.s32.totalorder %s104, %s105
      %p117 = scmp.eq.s32.totalorder %s25, 1
      %p118 = por %p116, %p117
      %p120 = scmp.ne.s32.totalorder %s105, %s119
      %p121 = scmp.eq.s32.totalorder %s25, 0
      %p122 = por %p120, %p121
      %s124 = sadd.s32 %s123, 1
      %p127 = scmp.eq.s32.totalorder %s19, 1
      %p128 = scmp.ne.s32.totalorder %s123, %s125
      %p129 = scmp.eq.s32.totalorder %s19, 0
      %p130 = por %p128, %p129
      %p131 = scmp.ne.s32.totalorder %s123, %s125
      %p132 = scmp.eq.s32.totalorder %s24, 1
      %p133 = por %p131, %p132
      %p134 = scmp.ne.s32.totalorder %s125, %s126
      %p135 = scmp.eq.s32.totalorder %s24, 0
      %p136 = por %p134, %p135
      %p137 = scmp.ne.s32.totalorder %s125, %s126
      %p138 = scmp.eq.s32.totalorder %s25, 1
      %p139 = por %p137, %p138
      %p141 = scmp.ne.s32.totalorder %s126, %s140
      %p142 = scmp.eq.s32.totalorder %s25, 0
      %p143 = por %p141, %p142
      %s144 = ssub.s32 %s26, %s38
      %s145 = ssub.s32 %s27, %s34
      %s146 = sor.u32 %s144, %s145
      %p147 = scmp.eq.s32.totalorder %s146, 0
      %s149 = sadd.s32 %s148, 1
      %s150 = scalar_select %p147, %s148, %s149
      %p153 = pneg %p147
      %p154 = scmp.eq.s32.totalorder %s19, 1
      %p155 = por %p153, %p154
      %p156 = scmp.ne.s32.totalorder %s148, %s151
      %p157 = scmp.eq.s32.totalorder %s19, 0
      %p158 = por %p156, %p157
      %p159 = scmp.ne.s32.totalorder %s148, %s151
      %p160 = scmp.eq.s32.totalorder %s24, 1
      %p161 = por %p159, %p160
      %p162 = scmp.ne.s32.totalorder %s151, %s152
      %p163 = scmp.eq.s32.totalorder %s24, 0
      %p164 = por %p162, %p163
      %p165 = scmp.ne.s32.totalorder %s151, %s152
      %p166 = scmp.eq.s32.totalorder %s25, 1
      %p167 = por %p165, %p166
      %p169 = scmp.ne.s32.totalorder %s152, %s168
      %p170 = scmp.eq.s32.totalorder %s25, 0
      %p171 = por %p169, %p170
      %s172 = ssub.s32 %s26, %s38
      %s173 = ssub.s32 %s27, %s34
      %s174 = sor.u32 %s172, %s173
      %p175 = scmp.eq.s32.totalorder %s174, 0
      %s177 = sadd.s32 %s176, 1
      %s178 = scalar_select %p175, %s176, %s177
      %p181 = pneg %p175
      %p182 = scmp.eq.s32.totalorder %s19, 1
      %p183 = por %p181, %p182
      %p184 = scmp.ne.s32.totalorder %s176, %s179
      %p185 = scmp.eq.s32.totalorder %s19, 0
      %p186 = por %p184, %p185
      %p187 = scmp.ne.s32.totalorder %s176, %s179
      %p188 = scmp.eq.s32.totalorder %s24, 1
      %p189 = por %p187, %p188
      %p190 = scmp.ne.s32.totalorder %s179, %s180
      %p191 = scmp.eq.s32.totalorder %s24, 0
      %p192 = por %p190, %p191
      %p193 = scmp.ne.s32.totalorder %s179, %s180
      %p194 = scmp.eq.s32.totalorder %s25, 1
      %p195 = por %p193, %p194
      %p197 = scmp.ne.s32.totalorder %s180, %s196
      %p198 = scmp.eq.s32.totalorder %s25, 0
      %p199 = por %p197, %p198
      %p200 = scmp.le.s32.totalorder 1, %s19
      %p201 = scmp.lt.s32.totalorder %s19, 3
      %p202 = pnand %p200, %p201
      %p203 = pneg %p202
      // Predicated region
      $region9: #{tpu_custom_call.1} parent=5 // pred_check
        _
      $region10: #{tpu_custom_call.1} parent=5 // pred_check_branch
        %205 = sbr.rel (%p202) target = $region12
      $region11: #{tpu_custom_call.1} parent=5 // pred_region
        %s206 = ssub.s32 %s19, 1
        // Predicated region
        $region13: #{tpu_custom_call.1} parent=11 // pred_check
          %p207 = pneg %p52
        $region14: #{tpu_custom_call.1} parent=11 // pred_check_branch
          %209 = sbr.rel (%p207) target = $region16
        $region15: #{tpu_custom_call.1} parent=11 // pred_region
          %s211 = ssub.s32 16, 16
          %212 = vsyncadd [#allocation4], %s211
          %215 = dma.hbm_to_smem %s0, 16, [#allocation2], [#allocation4]
        $region16: #{tpu_custom_call.1} parent=11 // pred_fallthru
          _
        // Predicated region
        $region17: #{tpu_custom_call.1} parent=11 // pred_check
          %p216 = pneg %p73
        $region18: #{tpu_custom_call.1} parent=11 // pred_check_branch
          %218 = sbr.rel (%p216) target = $region20
        $region19: #{tpu_custom_call.1} parent=11 // pred_region
          %s220 = ssub.s32 16, 16
          %221 = vsyncadd [#allocation5], %s220
          %s223 = sshll.u32 %s1, 4
          %s224 = int_to_ptr.vmem [resolvable:$true] %s223
          %226 = dma.vmem_to_smem %s224, 16, [#allocation6], [#allocation5]
        $region20: #{tpu_custom_call.1} parent=11 // pred_fallthru
          _
        // Predicated region
        $region21: #{tpu_custom_call.1} parent=11 // pred_check
          %p227 = pneg %p94
        $region22: #{tpu_custom_call.1} parent=11 // pred_check_branch
          %229 = sbr.rel (%p227) target = $region24
        $region23: #{tpu_custom_call.1} parent=11 // pred_region
          %s231 = ssub.s32 16, 16
          %232 = vsyncadd [#allocation8], %s231
          %s234 = sshll.u32 %s2, 4
          %s235 = int_to_ptr.vmem [resolvable:$true] %s234
          %237 = dma.vmem_to_smem %s235, 16, [#allocation7], [#allocation8]
        $region24: #{tpu_custom_call.1} parent=11 // pred_fallthru
          _
        // Predicated region
        $region25: #{tpu_custom_call.1} parent=11 // pred_check
          %p238 = pneg %p115
        $region26: #{tpu_custom_call.1} parent=11 // pred_check_branch
          %240 = sbr.rel (%p238) target = $region28
        $region27: #{tpu_custom_call.1} parent=11 // pred_region
          %s242 = ssub.s32 16, 16
          %243 = vsyncadd [#allocation10], %s242
          %246 = dma.hbm_to_smem %s3, 16, [#allocation9], [#allocation10]
        $region28: #{tpu_custom_call.1} parent=11 // pred_fallthru
          _
        // Predicated region
        $region29: #{tpu_custom_call.1} parent=11 // pred_check
          %p247 = pneg %p136
        $region30: #{tpu_custom_call.1} parent=11 // pred_check_branch
          %249 = sbr.rel (%p247) target = $region32
        $region31: #{tpu_custom_call.1} parent=11 // pred_region
          %s251 = ssub.s32 16, 16
          %252 = vsyncadd [#allocation10], %s251
          %255 = dma.hbm_to_smem %s4, 16, [#allocation11], [#allocation10]
        $region32: #{tpu_custom_call.1} parent=11 // pred_fallthru
          _
      $region12: #{tpu_custom_call.1} parent=5 // pred_fallthru
        _
      %p256 = scmp.lt.s32.totalorder %s19, 2
      // Predicated region
      $region33: #{tpu_custom_call.1} parent=5 // pred_check
        %p257 = pneg %p256
      $region34: #{tpu_custom_call.1} parent=5 // pred_check_branch
        %259 = sbr.rel (%p257) target = $region36
      $region35: #{tpu_custom_call.1} parent=5 // pred_region
        // Predicated region
        $region37: #{tpu_custom_call.1} parent=35 // pred_check
          %p260 = pneg %p158
        $region38: #{tpu_custom_call.1} parent=35 // pred_check_branch
          %262 = sbr.rel (%p260) target = $region40
        $region39: #{tpu_custom_call.1} parent=35 // pred_region
          %p263 = scmp.lt.s32.totalorder %s26, 0
          %s264 = scalar_select %p263, %s26, 0
          %p265 = scmp.lt.s32.totalorder %s27, 1
          %s266 = scalar_select %p265, %s27, 1
          %s267 = smul.addr %s264, 2
          %s268 = sadd.s32 %s266, %s267
          %s269 = smul.addr %s268, 8
          %s270 = scalar_lea.vmem %s5, %s269
        $region40: #{tpu_custom_call.1} parent=35 // pred_fallthru
          _
      $region36: #{tpu_custom_call.1} parent=5 // pred_fallthru
        _
      %p271 = scmp.le.s32.totalorder 1, %s19
      %p272 = scmp.lt.s32.totalorder %s19, 3
      %p273 = pnand %p271, %p272
      %p274 = pneg %p273
      // Predicated region
      $region41: #{tpu_custom_call.1} parent=5 // pred_check
        _
      $region42: #{tpu_custom_call.1} parent=5 // pred_check_branch
        %276 = sbr.rel (%p273) target = $region44
      $region43: #{tpu_custom_call.1} parent=5 // pred_region
        %s277 = ssub.s32 %s19, 1
        // Predicated region
        $region45: #{tpu_custom_call.1} parent=43 // pred_check
          %p278 = pneg %p52
        $region46: #{tpu_custom_call.1} parent=43 // pred_check_branch
          %280 = sbr.rel (%p278) target = $region48
        $region47: #{tpu_custom_call.1} parent=43 // pred_region
          %281 = dma.done [#allocation4], 16
        $region48: #{tpu_custom_call.1} parent=43 // pred_fallthru
          _
        // Predicated region
        $region49: #{tpu_custom_call.1} parent=43 // pred_check
          %p282 = pneg %p73
        $region50: #{tpu_custom_call.1} parent=43 // pred_check_branch
          %284 = sbr.rel (%p282) target = $region52
        $region51: #{tpu_custom_call.1} parent=43 // pred_region
          %285 = dma.done [#allocation5], 16
        $region52: #{tpu_custom_call.1} parent=43 // pred_fallthru
          _
        // Predicated region
        $region53: #{tpu_custom_call.1} parent=43 // pred_check
          %p286 = pneg %p94
        $region54: #{tpu_custom_call.1} parent=43 // pred_check_branch
          %288 = sbr.rel (%p286) target = $region56
        $region55: #{tpu_custom_call.1} parent=43 // pred_region
          %289 = dma.done [#allocation8], 16
        $region56: #{tpu_custom_call.1} parent=43 // pred_fallthru
          _
        // Predicated region
        $region57: #{tpu_custom_call.1} parent=43 // pred_check
          %p290 = pneg %p115
        $region58: #{tpu_custom_call.1} parent=43 // pred_check_branch
          %292 = sbr.rel (%p290) target = $region60
        $region59: #{tpu_custom_call.1} parent=43 // pred_region
          %293 = dma.done [#allocation10], 16
        $region60: #{tpu_custom_call.1} parent=43 // pred_fallthru
          _
        // Predicated region
        $region61: #{tpu_custom_call.1} parent=43 // pred_check
          %p294 = pneg %p136
        $region62: #{tpu_custom_call.1} parent=43 // pred_check_branch
          %296 = sbr.rel (%p294) target = $region64
        $region63: #{tpu_custom_call.1} parent=43 // pred_region
          %297 = dma.done [#allocation10], 16
        $region64: #{tpu_custom_call.1} parent=43 // pred_fallthru
          _
        %298 = sfence
        %p299 = pneg %p52
        %p300 = pneg %p49
        %p301 = pneg %p73
        %p302 = pneg %p70
        %p303 = pneg %p94
        %p304 = pneg %p91
        %p305 = pneg %p115
        %p306 = pneg %p112
        %p307 = pneg %p136
        %p308 = pneg %p133
        %p309 = scmp.lt.s32.totalorder %s28, 0
        %s310 = scalar_select %p309, %s28, 0
        %p311 = scmp.lt.s32.totalorder %s29, 1
        %s312 = scalar_select %p311, %s29, 1
        %s313 = smul.addr %s310, 2
        %s314 = sadd.s32 %s312, %s313
        %s315 = smul.addr %s314, 8
        %s316 = scalar_lea.vmem %s5, %s315
        %p317 = pneg %p164
        %p318 = pneg %p161
        %p319 = pneg %p192
        %p320 = pneg %p189
        %s321 = sand.u32 %s179, 1
        %s322 = scalar_lea.sflag [#allocation3], %s321
        %s323 = sand.u32 %s179, 1
        %s324 = smul.addr %s323, 8
        %s325 = scalar_lea.vmem [#allocation12], %s324
        %p326 = scmp.lt.s32.totalorder %s28, 0
        %s327 = scalar_select %p326, %s28, 0
        %p328 = scmp.lt.s32.totalorder %s29, 1
        %s329 = scalar_select %p328, %s29, 1
        %s330 = smul.addr %s327, 2
        %s331 = sadd.s32 %s329, %s330
        %s332 = smul.addr %s331, 8
        %s333 = scalar_lea.vmem %s5, %s332
        %v334 = vld [vmem:[%s333] sm:$0xff]
        %s335 = sld [smem:[#allocation2]]
        %s336 = sld [smem:[#allocation2 + $0x1]]
        %s337 = sld [smem:[#allocation2 + $0x2]]
        %s338 = sld [smem:[#allocation2 + $0x3]]
        %s339 = sld [smem:[#allocation6]]
        %s340 = sld [smem:[#allocation6 + $0x1]]
        %s341 = sld [smem:[#allocation6 + $0x2]]
        %s342 = sld [smem:[#allocation6 + $0x3]]
        %s343 = sld [smem:[#allocation7]]
        %s344 = sld [smem:[#allocation7 + $0x1]]
        %s345 = sld [smem:[#allocation7 + $0x2]]
        %s346 = sld [smem:[#allocation7 + $0x3]]
        %s347 = sld [smem:[#allocation9]]
        %s348 = sld [smem:[#allocation9 + $0x1]]
        %s349 = sld [smem:[#allocation9 + $0x2]]
        %s350 = sld [smem:[#allocation9 + $0x3]]
        %s351 = sld [smem:[#allocation11]]
        %s352 = sld [smem:[#allocation11 + $0x1]]
        %s353 = sld [smem:[#allocation11 + $0x2]]
        %s354 = sld [smem:[#allocation11 + $0x3]]
        %v355 = vmax.f32 %v334, 1e-38
        %v356 = vlog2.pop %v355
        %v357 = vmul.f32 %v356, 0.6931472
        %v358 = vstv %s351
        %v359 = vmul.f32 %v358, %v357
        %v360 = vstv %s347
        %v361 = vsub.f32 %v360, %v359
        %v362 = vmax.f32 %v361, 0.0
        %v363 = vstv %s352
        %v364 = vmul.f32 %v363, %v357
        %v365 = vstv %s348
        %v366 = vsub.f32 %v365, %v364
        %v367 = vmax.f32 %v362, %v366
        %v368 = vstv %s353
        %v369 = vmul.f32 %v368, %v357
        %v370 = vstv %s349
        %v371 = vsub.f32 %v370, %v369
        %v372 = vmax.f32 %v367, %v371
        %v373 = vstv %s354
        %v374 = vmul.f32 %v373, %v357
        %v375 = vstv %s350
        %v376 = vsub.f32 %v375, %v374
        %v377 = vmax.f32 %v372, %v376
        // While loop
        $region65: #{tpu_custom_call.1} parent=43 // loop_pre_header
          _
        $region66: #{tpu_custom_call.1} parent=43 // loop_header
          %s379 = sphi 0, %s664
          %v380 = vphi %v377, %v663
          %s381 = sphi inf, %s674
          %p382 = scmp.lt.s32.totalorder %s379, 2000
          %p383 = scmp.ge.f32.partialorder %s381, 1e-06
          %p384 = pnand %p382, %p383
          %p385 = pneg %p384
        $region67: #{tpu_custom_call.1} parent=43 // loop_header_branch
          %387 = sbr.rel (%p384) target = $region71
        $region68: #{tpu_custom_call.1} parent=43 // loop_body
          %v388 = vstv %s339
          %v389 = vmul.f32 %v388, %v380
          %v390 = vmul.f32 %v389, 1.442695
          %v391 = vpow.pop %v390
          %v392 = vstv %s335
          %v393 = vmul.f32 %v392, %v391
          %v394 = vadd.f32 %v393, 0.0
          %v395 = vstv %s343
          %v396 = vmul.f32 %v395, %v391
          %v397 = vadd.f32 %v396, 0.0
          %v398 = vstv %s340
          %v399 = vmul.f32 %v398, %v380
          %v400 = vmul.f32 %v399, 1.442695
          %v401 = vpow.pop %v400
          %v402 = vstv %s336
          %v403 = vmul.f32 %v402, %v401
          %v404 = vadd.f32 %v394, %v403
          %v405 = vstv %s344
          %v406 = vmul.f32 %v405, %v401
          %v407 = vadd.f32 %v397, %v406
          %v408 = vstv %s341
          %v409 = vmul.f32 %v408, %v380
          %v410 = vmul.f32 %v409, 1.442695
          %v411 = vpow.pop %v410
          %v412 = vstv %s337
          %v413 = vmul.f32 %v412, %v411
          %v414 = vadd.f32 %v404, %v413
          %v415 = vstv %s345
          %v416 = vmul.f32 %v415, %v411
          %v417 = vadd.f32 %v407, %v416
          %v418 = vstv %s342
          %v419 = vmul.f32 %v418, %v380
          %v420 = vmul.f32 %v419, 1.442695
          %v421 = vpow.pop %v420
          %v422 = vstv %s338
          %v423 = vmul.f32 %v422, %v421
          %v424 = vadd.f32 %v414, %v423
          %v425 = vstv %s346
          %v426 = vmul.f32 %v425, %v421
          %v427 = vadd.f32 %v417, %v426
          %v428 = vsub.f32 %v424, %v334
          %v429 = vmax.f32 %v427, 1e-30
          %v430 = vrcp.pop %v429
          %v431 = vmul.f32 %v428, %v430
          %v432 = vadd.f32 %v380, %v431
          %v433 = vmul.f32 %v388, %v432
          %v434 = vmul.f32 %v433, 1.442695
          %v435 = vpow.pop %v434
          %v436 = vmul.f32 %v392, %v435
          %v437 = vadd.f32 %v436, 0.0
          %v438 = vmul.f32 %v395, %v435
          %v439 = vadd.f32 %v438, 0.0
          %v440 = vmul.f32 %v398, %v432
          %v441 = vmul.f32 %v440, 1.442695
          %v442 = vpow.pop %v441
          %v443 = vmul.f32 %v402, %v442
          %v444 = vadd.f32 %v437, %v443
          %v445 = vmul.f32 %v405, %v442
          %v446 = vadd.f32 %v439, %v445
          %v447 = vmul.f32 %v408, %v432
          %v448 = vmul.f32 %v447, 1.442695
          %v449 = vpow.pop %v448
          %v450 = vmul.f32 %v412, %v449
          %v451 = vadd.f32 %v444, %v450
          %v452 = vmul.f32 %v415, %v449
          %v453 = vadd.f32 %v446, %v452
          %v454 = vmul.f32 %v418, %v432
          %v455 = vmul.f32 %v454, 1.442695
          %v456 = vpow.pop %v455
          %v457 = vmul.f32 %v422, %v456
          %v458 = vadd.f32 %v451, %v457
          %v459 = vmul.f32 %v425, %v456
          %v460 = vadd.f32 %v453, %v459
          %v461 = vsub.f32 %v458, %v334
          %v462 = vmax.f32 %v460, 1e-30
          %v463 = vrcp.pop %v462
          %v464 = vmul.f32 %v461, %v463
          %v465 = vadd.f32 %v432, %v464
          %v466 = vmul.f32 %v388, %v465
          %v467 = vmul.f32 %v466, 1.442695
          %v468 = vpow.pop %v467
          %v469 = vmul.f32 %v392, %v468
          %v470 = vadd.f32 %v469, 0.0
          %v471 = vmul.f32 %v395, %v468
          %v472 = vadd.f32 %v471, 0.0
          %v473 = vmul.f32 %v398, %v465
          %v474 = vmul.f32 %v473, 1.442695
          %v475 = vpow.pop %v474
          %v476 = vmul.f32 %v402, %v475
          %v477 = vadd.f32 %v470, %v476
          %v478 = vmul.f32 %v405, %v475
          %v479 = vadd.f32 %v472, %v478
          %v480 = vmul.f32 %v408, %v465
          %v481 = vmul.f32 %v480, 1.442695
          %v482 = vpow.pop %v481
          %v483 = vmul.f32 %v412, %v482
          %v484 = vadd.f32 %v477, %v483
          %v485 = vmul.f32 %v415, %v482
          %v486 = vadd.f32 %v479, %v485
          %v487 = vmul.f32 %v418, %v465
          %v488 = vmul.f32 %v487, 1.442695
          %v489 = vpow.pop %v488
          %v490 = vmul.f32 %v422, %v489
          %v491 = vadd.f32 %v484, %v490
          %v492 = vmul.f32 %v425, %v489
          %v493 = vadd.f32 %v486, %v492
          %v494 = vsub.f32 %v491, %v334
          %v495 = vmax.f32 %v493, 1e-30
          %v496 = vrcp.pop %v495
          %v497 = vmul.f32 %v494, %v496
          %v498 = vadd.f32 %v465, %v497
          %v499 = vmul.f32 %v388, %v498
          %v500 = vmul.f32 %v499, 1.442695
          %v501 = vpow.pop %v500
          %v502 = vmul.f32 %v392, %v501
          %v503 = vadd.f32 %v502, 0.0
          %v504 = vmul.f32 %v395, %v501
          %v505 = vadd.f32 %v504, 0.0
          %v506 = vmul.f32 %v398, %v498
          %v507 = vmul.f32 %v506, 1.442695
          %v508 = vpow.pop %v507
          %v509 = vmul.f32 %v402, %v508
          %v510 = vadd.f32 %v503, %v509
          %v511 = vmul.f32 %v405, %v508
          %v512 = vadd.f32 %v505, %v511
          %v513 = vmul.f32 %v408, %v498
          %v514 = vmul.f32 %v513, 1.442695
          %v515 = vpow.pop %v514
          %v516 = vmul.f32 %v412, %v515
          %v517 = vadd.f32 %v510, %v516
          %v518 = vmul.f32 %v415, %v515
          %v519 = vadd.f32 %v512, %v518
          %v520 = vmul.f32 %v418, %v498
          %v521 = vmul.f32 %v520, 1.442695
          %v522 = vpow.pop %v521
          %v523 = vmul.f32 %v422, %v522
          %v524 = vadd.f32 %v517, %v523
          %v525 = vmul.f32 %v425, %v522
          %v526 = vadd.f32 %v519, %v525
          %v527 = vsub.f32 %v524, %v334
          %v528 = vmax.f32 %v526, 1e-30
          %v529 = vrcp.pop %v528
          %v530 = vmul.f32 %v527, %v529
          %v531 = vadd.f32 %v498, %v530
          %v532 = vmul.f32 %v388, %v531
          %v533 = vmul.f32 %v532, 1.442695
          %v534 = vpow.pop %v533
          %v535 = vmul.f32 %v392, %v534
          %v536 = vadd.f32 %v535, 0.0
          %v537 = vmul.f32 %v395, %v534
          %v538 = vadd.f32 %v537, 0.0
          %v539 = vmul.f32 %v398, %v531
          %v540 = vmul.f32 %v539, 1.442695
          %v541 = vpow.pop %v540
          %v542 = vmul.f32 %v402, %v541
          %v543 = vadd.f32 %v536, %v542
          %v544 = vmul.f32 %v405, %v541
          %v545 = vadd.f32 %v538, %v544
          %v546 = vmul.f32 %v408, %v531
          %v547 = vmul.f32 %v546, 1.442695
          %v548 = vpow.pop %v547
          %v549 = vmul.f32 %v412, %v548
          %v550 = vadd.f32 %v543, %v549
          %v551 = vmul.f32 %v415, %v548
          %v552 = vadd.f32 %v545, %v551
          %v553 = vmul.f32 %v418, %v531
          %v554 = vmul.f32 %v553, 1.442695
          %v555 = vpow.pop %v554
          %v556 = vmul.f32 %v422, %v555
          %v557 = vadd.f32 %v550, %v556
          %v558 = vmul.f32 %v425, %v555
          %v559 = vadd.f32 %v552, %v558
          %v560 = vsub.f32 %v557, %v334
          %v561 = vmax.f32 %v559, 1e-30
          %v562 = vrcp.pop %v561
          %v563 = vmul.f32 %v560, %v562
          %v564 = vadd.f32 %v531, %v563
          %v565 = vmul.f32 %v388, %v564
          %v566 = vmul.f32 %v565, 1.442695
          %v567 = vpow.pop %v566
          %v568 = vmul.f32 %v392, %v567
          %v569 = vadd.f32 %v568, 0.0
          %v570 = vmul.f32 %v395, %v567
          %v571 = vadd.f32 %v570, 0.0
          %v572 = vmul.f32 %v398, %v564
          %v573 = vmul.f32 %v572, 1.442695
          %v574 = vpow.pop %v573
          %v575 = vmul.f32 %v402, %v574
          %v576 = vadd.f32 %v569, %v575
          %v577 = vmul.f32 %v405, %v574
          %v578 = vadd.f32 %v571, %v577
          %v579 = vmul.f32 %v408, %v564
          %v580 = vmul.f32 %v579, 1.442695
          %v581 = vpow.pop %v580
          %v582 = vmul.f32 %v412, %v581
          %v583 = vadd.f32 %v576, %v582
          %v584 = vmul.f32 %v415, %v581
          %v585 = vadd.f32 %v578, %v584
          %v586 = vmul.f32 %v418, %v564
          %v587 = vmul.f32 %v586, 1.442695
          %v588 = vpow.pop %v587
          %v589 = vmul.f32 %v422, %v588
          %v590 = vadd.f32 %v583, %v589
          %v591 = vmul.f32 %v425, %v588
          %v592 = vadd.f32 %v585, %v591
          %v593 = vsub.f32 %v590, %v334
          %v594 = vmax.f32 %v592, 1e-30
          %v595 = vrcp.pop %v594
          %v596 = vmul.f32 %v593, %v595
          %v597 = vadd.f32 %v564, %v596
          %v598 = vmul.f32 %v388, %v597
          %v599 = vmul.f32 %v598, 1.442695
          %v600 = vpow.pop %v599
          %v601 = vmul.f32 %v392, %v600
          %v602 = vadd.f32 %v601, 0.0
          %v603 = vmul.f32 %v395, %v600
          %v604 = vadd.f32 %v603, 0.0
          %v605 = vmul.f32 %v398, %v597
          %v606 = vmul.f32 %v605, 1.442695
          %v607 = vpow.pop %v606
          %v608 = vmul.f32 %v402, %v607
          %v609 = vadd.f32 %v602, %v608
          %v610 = vmul.f32 %v405, %v607
          %v611 = vadd.f32 %v604, %v610
          %v612 = vmul.f32 %v408, %v597
          %v613 = vmul.f32 %v612, 1.442695
          %v614 = vpow.pop %v613
          %v615 = vmul.f32 %v412, %v614
          %v616 = vadd.f32 %v609, %v615
          %v617 = vmul.f32 %v415, %v614
          %v618 = vadd.f32 %v611, %v617
          %v619 = vmul.f32 %v418, %v597
          %v620 = vmul.f32 %v619, 1.442695
          %v621 = vpow.pop %v620
          %v622 = vmul.f32 %v422, %v621
          %v623 = vadd.f32 %v616, %v622
          %v624 = vmul.f32 %v425, %v621
          %v625 = vadd.f32 %v618, %v624
          %v626 = vsub.f32 %v623, %v334
          %v627 = vmax.f32 %v625, 1e-30
          %v628 = vrcp.pop %v627
          %v629 = vmul.f32 %v626, %v628
          %v630 = vadd.f32 %v597, %v629
          %v631 = vmul.f32 %v388, %v630
          %v632 = vmul.f32 %v631, 1.442695
          %v633 = vpow.pop %v632
          %v634 = vmul.f32 %v392, %v633
          %v635 = vadd.f32 %v634, 0.0
          %v636 = vmul.f32 %v395, %v633
          %v637 = vadd.f32 %v636, 0.0
          %v638 = vmul.f32 %v398, %v630
          %v639 = vmul.f32 %v638, 1.442695
          %v640 = vpow.pop %v639
          %v641 = vmul.f32 %v402, %v640
          %v642 = vadd.f32 %v635, %v641
          %v643 = vmul.f32 %v405, %v640
          %v644 = vadd.f32 %v637, %v643
          %v645 = vmul.f32 %v408, %v630
          %v646 = vmul.f32 %v645, 1.442695
          %v647 = vpow.pop %v646
          %v648 = vmul.f32 %v412, %v647
          %v649 = vadd.f32 %v642, %v648
          %v650 = vmul.f32 %v415, %v647
          %v651 = vadd.f32 %v644, %v650
          %v652 = vmul.f32 %v418, %v630
          %v653 = vmul.f32 %v652, 1.442695
          %v654 = vpow.pop %v653
          %v655 = vmul.f32 %v422, %v654
          %v656 = vadd.f32 %v649, %v655
          %v657 = vmul.f32 %v425, %v654
          %v658 = vadd.f32 %v651, %v657
          %v659 = vsub.f32 %v656, %v334
          %v660 = vmax.f32 %v658, 1e-30
          %v661 = vrcp.pop %v660
          %v662 = vmul.f32 %v659, %v661
          %v663 = vadd.f32 %v630, %v662
          %s664 = sadd.s32 %s379, 8
          %v665 = vand.u32 2147483647, %v659
          %666 = vmax.xlane.f32.xlu0 %v665
          %v667 = vpop.xlane.xlu0 %666
          %v668 = vrot.slane %v667, 4
          %v669 = vmax.f32 %v667, %v668
          %v670 = vrot.slane %v669, 2
          %v671 = vmax.f32 %v669, %v670
          %v672 = vrot.slane %v671, 1
          %v673 = vmax.f32 %v671, %v672
          %s674 = vtos %v673
        $region69: #{tpu_custom_call.1} parent=43 // loop_footer
          _
        $region70: #{tpu_custom_call.1} parent=43 // loop_footer_branch
          %378 = sbr.rel target = $region66
        $region71: #{tpu_custom_call.1} parent=43 // loop_exit
          _
        %675 = vst [vmem:[%s325] sm:$0xff] %v380
        %s676 = sand.u32 %s179, 1
        %s677 = scalar_lea.sflag [#allocation3], %s676
        %s678 = sand.u32 %s179, 1
        %s679 = smul.addr %s678, 8
        %s680 = scalar_lea.vmem [#allocation12], %s679
        // Predicated region
        $region72: #{tpu_custom_call.1} parent=43 // pred_check
          %p681 = pneg %p189
        $region73: #{tpu_custom_call.1} parent=43 // pred_check_branch
          %683 = sbr.rel (%p681) target = $region75
        $region74: #{tpu_custom_call.1} parent=43 // pred_region
          %s685 = ssub.s32 128, 128
          %686 = vsyncadd %s677, %s685
          %s687 = smul.addr %s28, 2
          %s688 = sadd.s32 %s29, %s687
          %s689 = smul.addr %s688, 128
          %s690 = scalar_lea.hbm %s6, %s689
          %s692 = sshll.u32 %s680, 4
          %s693 = int_to_ptr.vmem [resolvable:$true] %s692
          %695 = dma.vmem_to_hbm [thread:$0]  %s693, 128, %s690, %s677
        $region75: #{tpu_custom_call.1} parent=43 // pred_fallthru
          _
      $region44: #{tpu_custom_call.1} parent=5 // pred_fallthru
        _
      %p696 = scmp.le.s32.totalorder 2, %s19
      // Predicated region
      $region76: #{tpu_custom_call.1} parent=5 // pred_check
        %p697 = pneg %p696
      $region77: #{tpu_custom_call.1} parent=5 // pred_check_branch
        %699 = sbr.rel (%p697) target = $region79
      $region78: #{tpu_custom_call.1} parent=5 // pred_region
        %s700 = ssub.s32 %s19, 2
        // Predicated region
        $region80: #{tpu_custom_call.1} parent=78 // pred_check
          %p701 = pneg %p195
        $region81: #{tpu_custom_call.1} parent=78 // pred_check_branch
          %703 = sbr.rel (%p701) target = $region83
        $region82: #{tpu_custom_call.1} parent=78 // pred_region
          %s704 = sand.u32 %s180, 1
          %s705 = scalar_lea.sflag [#allocation3], %s704
          %s706 = sand.u32 %s180, 1
          %s707 = smul.addr %s706, 8
          %s708 = scalar_lea.vmem [#allocation12], %s707
          %709 = dma.done %s705, 128
        $region83: #{tpu_custom_call.1} parent=78 // pred_fallthru
          _
      $region79: #{tpu_custom_call.1} parent=5 // pred_fallthru
        _
    $region6: #{tpu_custom_call.1} parent=1 // loop_footer
      %s23 = sadd.s32 1, %s19
    $region7: #{tpu_custom_call.1} parent=1 // loop_footer_branch
      %18 = sbr.rel target = $region3
    $region8: #{tpu_custom_call.1} parent=1 // loop_exit
      _
    %710 = vsyncpa [#allocation3], 1
    %s711 = scalar_lea.sflag [#allocation3], 1
    %712 = vsyncpa %s711, 1
    %713 = vsyncpa [#allocation4], 1
    %s714 = scalar_lea.sflag [#allocation4], 1
    %715 = vsyncpa %s714, 1
    %716 = vsyncpa [#allocation10], 1
    %717 = vsyncpa [#allocation5], 1
    %s718 = scalar_lea.sflag [#allocation5], 1
    %719 = vsyncpa %s718, 1
    %720 = vsyncpa [#allocation8], 1

</llo_original>
